<compile_context>
chip_gen: v7x
topology: tpu7x:2x2x1
jax: 0.10.0
libtpu: 0.0.40
codegen_flags: <defaults>
</compile_context>

<pallas_src>
import math
import jax
import jax.numpy as jnp
from jax.experimental import pallas as pl
from jax.experimental.pallas import tpu as pltpu


def _head_kernel(x_ref, w_ref, b_ref, o_ref, acc_ref):
    # x_ref: (tB, tS, D) VMEM   w_ref: (1, D) VMEM (pre-scaled by 1/S)
    # b_ref: (1, 1) SMEM        o_ref: (tB, 1)     acc_ref: (tB, 1) f32 scratch
    k = pl.program_id(1)

    @pl.when(k == 0)
    def _init():
        acc_ref[...] = jnp.zeros_like(acc_ref)

    x = x_ref[...].astype(jnp.float32)            # (tB, tS, D)
    w = w_ref[...].astype(jnp.float32)            # (1, D) -> broadcasts as (1, 1, D)
    xw = x * w                                    # VPU multiply, no MXU
    partial = jnp.sum(xw, axis=1)                 # (tB, D)  reduce over seq tile
    partial = jnp.sum(partial, axis=-1, keepdims=True)  # (tB, 1) lane reduce
    acc_ref[...] += partial

    @pl.when(k == pl.num_programs(1) - 1)
    def _finalize():
        logits = acc_ref[...] + b_ref[0, 0]       # scalar bias from SMEM
        o_ref[...] = (1.0 / (1.0 + jnp.exp(-logits))).astype(o_ref.dtype)


def _largest_divisor(n, cap, multiple=1):
    """Largest d dividing n with d <= cap and d % multiple == 0 (None if absent)."""
    best = None
    for d in range(1, n + 1):
        if n % d == 0 and d <= cap and d % multiple == 0:
            best = d
    return best


def _pick_tiles(B, S, D, itemsize, target_bytes=2 << 20):
    """Pick (tB, tS) so tB*tS*D*itemsize ~ target_bytes, divisibility-safe.

    Keeps D whole (satisfies the (8,128) rule on the last dim); tS is a multiple
    of 8 (or the full S); tB is a multiple of 8 (or the full B).
    Target ~2 MiB per buffer -> ~4-5 MiB with double buffering: fits the scoped
    VMEM defaults on v5e (16 MiB), v6e (32 MiB) and v7x (32 MiB / 64 MiB phys).
    """
    row_bytes = max(1, D * itemsize)
    cap_s = max(1, target_bytes // (8 * row_bytes))
    tS = _largest_divisor(S, cap_s, multiple=8)
    if tS is None:
        tS = S  # full sequence dim is always a legal block extent
    cap_b = max(1, target_bytes // (tS * row_bytes))
    tB = _largest_divisor(B, cap_b, multiple=8)
    if tB is None:
        tB = B  # full batch dim is always a legal block extent
    return tB, tS


def classification_head(x, weight, bias):
    """x: (B, S, D) f32/bf16; weight: (1, D); bias: (1,). Returns (B, 1) f32."""
    B, S, D = x.shape
    tB, tS = _pick_tiles(B, S, D, jnp.dtype(x.dtype).itemsize)

    # Fold the mean's 1/S into the weight: mean-then-dot == (sum * w/S)-then-add-bias.
    w_scaled = (weight.astype(jnp.float32) / jnp.float32(S)).reshape(1, D)
    b2d = bias.astype(jnp.float32).reshape(1, 1)

    grid = (B // tB, S // tS)

    grid_spec = pltpu.PrefetchScalarGridSpec(
        num_scalar_prefetch=0,
        grid=grid,
        in_specs=[
            pl.BlockSpec((tB, tS, D), lambda i, k: (i, k, 0)),        # x, streamed
            pl.BlockSpec((1, D), lambda i, k: (0, 0)),                # scaled weight
            pl.BlockSpec(memory_space=pltpu.MemorySpace.SMEM),        # bias scalar
        ],
        out_specs=pl.BlockSpec((tB, 1), lambda i, k: (i, 0)),
        scratch_shapes=[pltpu.VMEM((tB, 1), jnp.float32)],
    )

    return pl.pallas_call(
        _head_kernel,
        out_shape=jax.ShapeDtypeStruct((B, 1), jnp.float32),
        grid_spec=grid_spec,
        compiler_params=pltpu.CompilerParams(
            dimension_semantics=("parallel", "arbitrary"),
            vmem_limit_bytes=32 * 1024 * 1024,
        ),
    )(x, w_scaled, b2d)


if __name__ == "__main__":
    # Small shapes consistent with the module: batch=2, seq=8, d_model=32
    B, S, D = 2, 8, 32

    key = jax.random.PRNGKey(0)
    kx, kw, kb = jax.random.split(key, 3)

    x = jax.random.normal(kx, (B, S, D), dtype=jnp.float32)

    # Deterministic nn.Linear(d_model, 1)-style init: U(-1/sqrt(D), 1/sqrt(D))
    bound = 1.0 / math.sqrt(D)
    weight = jax.random.uniform(kw, (1, D), dtype=jnp.float32, minval=-bound, maxval=bound)
    bias = jax.random.uniform(kb, (1,), dtype=jnp.float32, minval=-bound, maxval=bound)

    out = classification_head(x, weight, bias)
    out = jax.block_until_ready(out)

    # Pure-JAX reference of the same semantics (mean -> linear -> sigmoid)
    ref = jax.nn.sigmoid(jnp.mean(x, axis=1) @ weight.T + bias)
    assert out.shape == (B, 1)
    assert jnp.allclose(out, ref, atol=1e-5, rtol=1e-5)

    print("KERNEL_OK")
</pallas_src>

<mosaic_0001>
module attributes {stable_mosaic.version = 11 : i64} {
  func.func @_head_kernel(%arg0: i32, %arg1: i32, %arg2: memref<2x8x32xf32, #tpu.memory_space<vmem>>, %arg3: memref<1x32xf32, #tpu.memory_space<vmem>>, %arg4: memref<1x1xf32, #tpu.memory_space<smem>>, %arg5: memref<2x1xf32, #tpu.memory_space<vmem>>, %arg6: memref<2x1xf32, #tpu.memory_space<vmem>>) attributes {dimension_semantics = [#tpu.dimension_semantics<parallel>, #tpu.dimension_semantics<arbitrary>], iteration_bounds = array<i64: 1, 1>, scalar_prefetch = 0 : i64, scratch_operands = 1 : i64, tpu.core_type = #tpu.core_type<tc>, window_params = [{transform_indices = @transform_0, window_bounds = array<i64: 2, 8, 32>}, {pipeline_mode = #tpu.pipeline_mode<synchronous>, transform_indices = @transform_1, window_bounds = array<i64: 1, 32>}, {transform_indices = @transform_2, window_bounds = array<i64: 1, 1>}, {transform_indices = @transform_3, window_bounds = array<i64: 2, 1>}]} {
    %c0_i32 = arith.constant 0 : i32
    %0 = arith.cmpi eq, %arg1, %c0_i32 : i32
    %1 = arith.extui %0 : i1 to i32
    %c0_i32_0 = arith.constant 0 : i32
    %2 = arith.cmpi ne, %1, %c0_i32_0 : i32
    scf.if %2 {
      %cst_12 = arith.constant 0.000000e+00 : f32
      %17 = vector.broadcast %cst_12 : f32 to vector<2x1xf32>
      %c0_13 = arith.constant 0 : index
      %c0_14 = arith.constant 0 : index
      %18 = vector.load %arg6[%c0_13, %c0_14] : memref<2x1xf32, #tpu.memory_space<vmem>>, vector<2x1xf32>
      tpu.vector_store %arg6[%c0_13, %c0_14], %17 {strides = array<i32>} : memref<2x1xf32, #tpu.memory_space<vmem>>, vector<2x1xf32>,
    } else {
    }
    %c0 = arith.constant 0 : index
    %c0_1 = arith.constant 0 : index
    %c0_2 = arith.constant 0 : index
    %3 = vector.load %arg2[%c0, %c0_1, %c0_2] : memref<2x8x32xf32, #tpu.memory_space<vmem>>, vector<2x8x32xf32>
    %c0_3 = arith.constant 0 : index
    %c0_4 = arith.constant 0 : index
    %4 = vector.load %arg3[%c0_3, %c0_4] : memref<1x32xf32, #tpu.memory_space<vmem>>, vector<1x32xf32>
    %5 = vector.shape_cast %4 : vector<1x32xf32> to vector<1x1x32xf32>
    %6 = vector.broadcast %5 : vector<1x1x32xf32> to vector<2x8x32xf32>
    %7 = arith.mulf %3, %6 : vector<2x8x32xf32>
    %cst = arith.constant dense<0.000000e+00> : vector<2x32xf32>
    %8 = vector.multi_reduction <add>, %7, %cst [1] : vector<2x8x32xf32> to vector<2x32xf32>
    %cst_5 = arith.constant dense<0.000000e+00> : vector<2xf32>
    %9 = vector.multi_reduction <add>, %8, %cst_5 [1] : vector<2x32xf32> to vector<2xf32>
    %10 = vector.shape_cast %9 : vector<2xf32> to vector<2x1xf32>
    %c0_6 = arith.constant 0 : index
    %c0_7 = arith.constant 0 : index
    %11 = vector.load %arg6[%c0_6, %c0_7] : memref<2x1xf32, #tpu.memory_space<vmem>>, vector<2x1xf32>
    %12 = arith.addf %11, %10 : vector<2x1xf32>
    %c0_8 = arith.constant 0 : index
    %c0_9 = arith.constant 0 : index
    %13 = vector.load %arg6[%c0_8, %c0_9] : memref<2x1xf32, #tpu.memory_space<vmem>>, vector<2x1xf32>
    tpu.vector_store %arg6[%c0_8, %c0_9], %12 {strides = array<i32>} : memref<2x1xf32, #tpu.memory_space<vmem>>, vector<2x1xf32>,
    %c0_i32_10 = arith.constant 0 : i32
    %14 = arith.cmpi eq, %arg1, %c0_i32_10 : i32
    %15 = arith.extui %14 : i1 to i32
    %c0_i32_11 = arith.constant 0 : i32
    %16 = arith.cmpi ne, %15, %c0_i32_11 : i32
    scf.if %16 {
      %c0_12 = arith.constant 0 : index
      %c0_13 = arith.constant 0 : index
      %17 = vector.load %arg6[%c0_12, %c0_13] : memref<2x1xf32, #tpu.memory_space<vmem>>, vector<2x1xf32>
      %c0_14 = arith.constant 0 : index
      %c0_15 = arith.constant 0 : index
      %18 = memref.load %arg4[%c0_14, %c0_15] : memref<1x1xf32, #tpu.memory_space<smem>>
      %19 = vector.broadcast %18 : f32 to vector<2x1xf32>
      %20 = arith.addf %17, %19 : vector<2x1xf32>
      %cst_16 = arith.constant 0.000000e+00 : f32
      %21 = vector.broadcast %cst_16 : f32 to vector<2x1xf32>
      %22 = arith.subf %21, %20 : vector<2x1xf32>
      %23 = math.exp %22 : vector<2x1xf32>
      %cst_17 = arith.constant 1.000000e+00 : f32
      %24 = vector.broadcast %cst_17 : f32 to vector<2x1xf32>
      %25 = arith.addf %24, %23 : vector<2x1xf32>
      %cst_18 = arith.constant 1.000000e+00 : f32
      %26 = vector.broadcast %cst_18 : f32 to vector<2x1xf32>
      %27 = arith.divf %26, %25 : vector<2x1xf32>
      %c0_19 = arith.constant 0 : index
      %c0_20 = arith.constant 0 : index
      %28 = vector.load %arg5[%c0_19, %c0_20] : memref<2x1xf32, #tpu.memory_space<vmem>>, vector<2x1xf32>
      tpu.vector_store %arg5[%c0_19, %c0_20], %27 {strides = array<i32>} : memref<2x1xf32, #tpu.memory_space<vmem>>, vector<2x1xf32>,
    } else {
    }
    return
  }
  func.func @transform_0(%arg0: i32, %arg1: i32) -> (i32, i32, i32) {
    %c0_i32 = arith.constant 0 : i32
    %c0_i32_0 = arith.constant 0 : i32
    return %arg0, %arg1, %c0_i32 : i32, i32, i32
  }
  func.func @transform_1(%arg0: i32, %arg1: i32) -> (i32, i32) {
    %c0_i32 = arith.constant 0 : i32
    %c0_i32_0 = arith.constant 0 : i32
    %c0_i32_1 = arith.constant 0 : i32
    return %c0_i32, %c0_i32_0 : i32, i32
  }
  func.func @transform_2(%arg0: i32, %arg1: i32) -> (i32, i32) {
    %c0_i32 = arith.constant 0 : i32
    %c0_i32_0 = arith.constant 0 : i32
    %c0_i32_1 = arith.constant 0 : i32
    return %c0_i32, %c0_i32_0 : i32, i32
  }
  func.func @transform_3(%arg0: i32, %arg1: i32) -> (i32, i32) {
    %c0_i32 = arith.constant 0 : i32
    %c0_i32_0 = arith.constant 0 : i32
    return %arg0, %c0_i32 : i32, i32
  }
}

</mosaic_0001>

<llo_original>
// kernel: tpu_custom_call.1
$region0: #{tpu_custom_call.1}
  #allocation0 [shape = 'u32[]', space=smem, size = 0x4, offset = 0x4, fixed_abs, tag = 'smem constant byte address 0x4 - core index']
  #allocation1 [shape = 'u32[144,128]{1,0:T(1,128)}', space=vmem, size = 0x12000, scoped, tag = 'internal scratch']
  #allocation2 [shape = 'f32[2,1]{1,0:T(2,128)}', space=vmem, size = 0x400, scoped, tag = 'scratch operand']
  #allocation3 [shape = 'f32[1,1]{1,0:T(1,128)S(6)}', space=smem, size = 0x200, scoped, tag = 'scoped memory for tpu_custom_call.1']
  %s0 = inlined_call_operand.hbm [shape: f32[2,8,32], index: 0, kind: input, shape index: {}]
  %s1 = inlined_call_operand.vmem [shape: f32[1,32], index: 1, kind: input, shape index: {}]
  %s2 = inlined_call_operand.<no memory space> [shape: f32[1,1], index: 2, kind: input, shape index: {}]
  %s3 = inlined_call_operand.vmem [shape: f32[2,1], index: 3, kind: output, shape index: {}]
  %s4 = sld [smem:[#allocation0]]
  $region34: #{tpu_custom_call.1} parent=0
    _
  %s6 = ssub.s32 1, %s4
  %s7 = scalar_select 0, %s6, %s4
  %8 = sst [smem:[#allocation3]] %s2
  $region1: #{tpu_custom_call.1} parent=0
    #allocation4 [shape = 'u8[8192]{0}', space=vmem, size = 0x2000, scoped, tag = 'input window, operand 0, single buffered']
    #allocation5 [shape = 's32[1]{0}', space=sflag, size = 0x4, scoped, tag = 'scoped memory for tpu_custom_call.1']
    %9 = vsyncpa [#allocation5], 0
    // Predicated region
    $region2: #{tpu_custom_call.1} parent=1 // pred_check
      _
    $region3: #{tpu_custom_call.1} parent=1 // pred_check_branch
      %11 = sbr.rel (0) target = $region5
    $region4: #{tpu_custom_call.1} parent=1 // pred_region
      %s13 = ssub.s32 256, 256
      %14 = vsyncadd [#allocation5], %s13
      %s15 = sshll.u32 [#allocation4], 4
      %s16 = int_to_ptr.vmem [resolvable:$true] %s15
      %21 = dma.hbm_to_vmem [thread:$0]  %s0, 256, %s16, [#allocation5], 128, 128, 8
    $region5: #{tpu_custom_call.1} parent=1 // pred_fallthru
      _
    // Predicated region
    $region6: #{tpu_custom_call.1} parent=1 // pred_check
      _
    $region7: #{tpu_custom_call.1} parent=1 // pred_check_branch
      %23 = sbr.rel (0) target = $region9
    $region8: #{tpu_custom_call.1} parent=1 // pred_region
      _
    $region9: #{tpu_custom_call.1} parent=1 // pred_fallthru
      _
    // Predicated region
    $region10: #{tpu_custom_call.1} parent=1 // pred_check
      _
    $region11: #{tpu_custom_call.1} parent=1 // pred_check_branch
      %25 = sbr.rel (0) target = $region13
    $region12: #{tpu_custom_call.1} parent=1 // pred_region
      _
    $region13: #{tpu_custom_call.1} parent=1 // pred_fallthru
      _
    // Predicated region
    $region14: #{tpu_custom_call.1} parent=1 // pred_check
      _
    $region15: #{tpu_custom_call.1} parent=1 // pred_check_branch
      %27 = sbr.rel (0) target = $region17
    $region16: #{tpu_custom_call.1} parent=1 // pred_region
      %28 = dma.done [#allocation5], 256
    $region17: #{tpu_custom_call.1} parent=1 // pred_fallthru
      _
    %p29 = scmp.eq.s32.totalorder 0, 0
    // Predicated region
    $region18: #{tpu_custom_call.1} parent=1 // pred_check
      %p30 = pneg %p29
    $region19: #{tpu_custom_call.1} parent=1 // pred_check_branch
      %32 = sbr.rel (%p30) target = $region21
    $region20: #{tpu_custom_call.1} parent=1 // pred_region
      %vm33 = vcmask 1024
      %34 = vst.msk [vmem:[#allocation2] sm:$0x3] %vm33, 0.0
    $region21: #{tpu_custom_call.1} parent=1 // pred_fallthru
      _
    %v35 = vld [vmem:[#allocation4] sm:$0xff]
    %v36 = vld [vmem:[#allocation4 + $0x8] sm:$0xff]
    %v37 = vld [vmem:[%s1] sm:$0x1]
    %v39 = vlaneseq
    %v40 = vshrl.u32 %v39, 7
    %v41 = vsub.s32 0, %v40
    %v42 = vrot.slane %v37, %v41
    %v44 = vmul.f32 %v35, %v42
    %v45 = vmul.f32 %v36, %v42
    %vm46 = vcmask 261120
    %v47 = vsel %vm46, %v44, 0.0
    %v48 = vrot.slane %v47, 4
    %v49 = vadd.f32 %v47, %v48
    %v50 = vrot.slane %v49, 2
    %v51 = vadd.f32 %v49, %v50
    %v52 = vrot.slane %v51, 1
    %v53 = vadd.f32 %v51, %v52
    %v54 = vsel %vm46, %v45, 0.0
    %v55 = vrot.slane %v54, 4
    %v56 = vadd.f32 %v54, %v55
    %v57 = vrot.slane %v56, 2
    %v58 = vadd.f32 %v56, %v57
    %v59 = vrot.slane %v58, 1
    %v60 = vadd.f32 %v58, %v59
    %vm63 = vcmask 1041409
    %v64 = vsel %vm63, %v60, %v53
    %vm66 = vcmask 254976
    %v67 = vsel %vm66, %v64, 0.0
    %68 = vadd.xlane.f32.xlu0 %v67
    %v69 = vpop.xlane.xlu0 %68
    %v70 = vld [vmem:[#allocation2] sm:$0x3]
    %v71 = vadd.f32 %v70, %v69
    %vm72 = vcmask 1024
    %73 = vst.msk [vmem:[#allocation2] sm:$0x3] %vm72, %v71
    // Predicated region
    $region22: #{tpu_custom_call.1} parent=1 // pred_check
      %p74 = pneg %p29
    $region23: #{tpu_custom_call.1} parent=1 // pred_check_branch
      %76 = sbr.rel (%p74) target = $region25
    $region24: #{tpu_custom_call.1} parent=1 // pred_region
      %v77 = vld [vmem:[#allocation2] sm:$0x3]
      %s78 = sld [smem:[#allocation3]]
      %v79 = vstv %s78
      %v80 = vadd.f32 %v77, %v79
      %v81 = vsub.f32 0.0, %v80
      %v82 = vmul.f32 %v81, 1.442695
      %v83 = vpow.pop %v82
      %v84 = vadd.f32 %v83, 1.0
      %v85 = vrcp.pop %v84
      %v86 = vmul.f32 1.0, %v85
      %87 = vst.msk [vmem:[%s3] sm:$0x3] %vm72, %v86
    $region25: #{tpu_custom_call.1} parent=1 // pred_fallthru
      _
    // Predicated region
    $region26: #{tpu_custom_call.1} parent=1 // pred_check
      _
    $region27: #{tpu_custom_call.1} parent=1 // pred_check_branch
      %89 = sbr.rel (0) target = $region29
    $region28: #{tpu_custom_call.1} parent=1 // pred_region
      _
    $region29: #{tpu_custom_call.1} parent=1 // pred_fallthru
      _
    // Predicated region
    $region30: #{tpu_custom_call.1} parent=1 // pred_check
      _
    $region31: #{tpu_custom_call.1} parent=1 // pred_check_branch
      %91 = sbr.rel (0) target = $region33
    $region32: #{tpu_custom_call.1} parent=1 // pred_region
      _
    $region33: #{tpu_custom_call.1} parent=1 // pred_fallthru
      _
    %92 = vsyncpa [#allocation5], 1

</llo_original>
